<compile_context>
chip_gen: v5e
topology: v5e:2x2
jax: 0.10.0
libtpu: 0.0.40
codegen_flags: <defaults>
</compile_context>

<pallas_src>
import functools

import jax
import jax.numpy as jnp
from jax import lax
from jax.experimental import pallas as pl
from jax.experimental.pallas import tpu as pltpu


NUM_OUT = 10          # 3 center + 3 size + 4 quat
OUT_PAD = 128         # lane-dense padded output width


def box_decoder_kernel(
    feat_ref,      # [TB, F]
    w_mlp_ref,     # [F, H]
    b_mlp_ref,     # [1, H]   (f32)
    w_skip_ref,    # [F, OUT_PAD]
    w_head_ref,    # [H, OUT_PAD]
    b_ref,         # [1, OUT_PAD]  (f32, quat offset folded in)
    out_ref,       # [TB, OUT_PAD] (f32)
):
    feat = feat_ref[...]

    # hidden = relu(mlp(feat))  -- accumulate in f32 regardless of operand dtype
    hidden = jnp.dot(feat, w_mlp_ref[...],
                     preferred_element_type=jnp.float32) + b_mlp_ref[...]
    hidden = jnp.maximum(hidden, 0.0)                                  # [TB, H] f32

    # Fused heads: y = feat @ w_skip + hidden @ w_head + b_fused
    y = (jnp.dot(feat, w_skip_ref[...], preferred_element_type=jnp.float32)
         + jnp.dot(hidden.astype(w_head_ref.dtype), w_head_ref[...],
                   preferred_element_type=jnp.float32)
         + b_ref[...])                                                 # [TB, OUT_PAD] f32

    lane = lax.broadcasted_iota(jnp.int32, y.shape, 1)
    center_mask = lane < 3
    size_mask = (lane >= 3) & (lane < 6)
    quat_mask = (lane >= 6) & (lane < NUM_OUT)

    # Quaternion: L2-normalize lanes 6..9 (offset already in the bias).
    q = jnp.where(quat_mask, y, 0.0)
    sumsq = jnp.sum(q * q, axis=1, keepdims=True)                      # [TB, 1]
    q = q * lax.rsqrt(sumsq + 1e-24)     # eps inside rsqrt guards the zero case

    out = jnp.where(center_mask, jnp.tanh(y),
                    jnp.where(size_mask, jax.nn.sigmoid(y) * 2.0, q))
    out_ref[...] = out


def _fuse_params(p):
    """Host-side fusion of the six head linears into two matmuls + one bias."""
    w_head = jnp.concatenate([p["w_c"], p["w_s"], p["w_q"]], axis=1)      # [H, 10]
    w_skip = jnp.concatenate([p["w_cs"], p["w_ss"], p["w_qs"]], axis=1)   # [F, 10]
    b = jnp.concatenate([p["b_c"] + p["b_cs"],
                         p["b_s"] + p["b_ss"],
                         p["b_q"] + p["b_qs"]], axis=1).astype(jnp.float32)  # [1, 10]
    b = b.at[0, 6].add(1.0)                        # fold quat +[1,0,0,0] into bias
    pad = OUT_PAD - NUM_OUT
    w_head = jnp.pad(w_head, ((0, 0), (0, pad)))
    w_skip = jnp.pad(w_skip, ((0, 0), (0, pad)))
    b = jnp.pad(b, ((0, 0), (0, pad)))
    return w_skip, w_head, b


def box_decoder(feat, params, *, tb=512, mxu_dtype=None):
    """feat: [B, F] f32.  params: dict of (weight [in,out], bias [1,out])."""
    B, F = feat.shape
    H = params["w_mlp"].shape[1]

    w_mlp, b_mlp = params["w_mlp"], params["b_mlp"].astype(jnp.float32)
    w_skip, w_head, b_fused = _fuse_params(params)

    if mxu_dtype is not None:                 # e.g. jnp.bfloat16 on v6e/v7x
        feat = feat.astype(mxu_dtype)
        w_mlp = w_mlp.astype(mxu_dtype)
        w_skip = w_skip.astype(mxu_dtype)
        w_head = w_head.astype(mxu_dtype)

    TB = min(B, tb)
    grid = (pl.cdiv(B, TB),)

    const = lambda i: (0, 0)
    out_padded = pl.pallas_call(
        box_decoder_kernel,
        out_shape=jax.ShapeDtypeStruct((B, OUT_PAD), jnp.float32),
        grid=grid,
        in_specs=[
            pl.BlockSpec((TB, F), lambda i: (i, 0)),      # feat tile (pipelined)
            pl.BlockSpec((F, H), const),                  # weights stay resident
            pl.BlockSpec((1, H), const),
            pl.BlockSpec((F, OUT_PAD), const),
            pl.BlockSpec((H, OUT_PAD), const),
            pl.BlockSpec((1, OUT_PAD), const),
        ],
        out_specs=pl.BlockSpec((TB, OUT_PAD), lambda i: (i, 0)),
        compiler_params=pltpu.CompilerParams(
            dimension_semantics=("parallel",),            # shard batch across TCs (v7x)
            vmem_limit_bytes=32 * 1024 * 1024,
        ),
    )(feat, w_mlp, b_mlp, w_skip, w_head, b_fused)

    return out_padded[:, :NUM_OUT]


def box_decoder_ref(feat, p):
    """Pure-JAX reference mirroring the PyTorch forward."""
    hidden = jax.nn.relu(feat @ p["w_mlp"] + p["b_mlp"])
    center = jnp.tanh(feat @ p["w_cs"] + p["b_cs"] + hidden @ p["w_c"] + p["b_c"])
    size = jax.nn.sigmoid(feat @ p["w_ss"] + p["b_ss"] + hidden @ p["w_s"] + p["b_s"]) * 2.0
    quat = feat @ p["w_qs"] + p["b_qs"] + hidden @ p["w_q"] + p["b_q"]
    quat = quat + jnp.array([[1.0, 0.0, 0.0, 0.0]], jnp.float32)
    quat = quat / (1e-12 + jnp.sqrt(jnp.sum(quat ** 2, axis=1, keepdims=True)))
    return jnp.concatenate([center, size, quat], axis=1)


def init_params(key, feature_size, hidden_size):
    def linear(k, fan_in, fan_out):
        kw, kb = jax.random.split(k)
        bound = 1.0 / jnp.sqrt(fan_in)
        w = jax.random.uniform(kw, (fan_in, fan_out), jnp.float32, -bound, bound)
        b = jax.random.uniform(kb, (1, fan_out), jnp.float32, -bound, bound)
        return w, b

    keys = jax.random.split(key, 7)
    p = {}
    p["w_mlp"], p["b_mlp"] = linear(keys[0], feature_size, hidden_size)
    p["w_c"],   p["b_c"]   = linear(keys[1], hidden_size, 3)
    p["w_s"],   p["b_s"]   = linear(keys[2], hidden_size, 3)
    p["w_q"],   p["b_q"]   = linear(keys[3], hidden_size, 4)
    p["w_cs"],  p["b_cs"]  = linear(keys[4], feature_size, 3)
    p["w_ss"],  p["b_ss"]  = linear(keys[5], feature_size, 3)
    p["w_qs"],  p["b_qs"]  = linear(keys[6], feature_size, 4)
    return p


if __name__ == "__main__":
    B, FEATURE, HIDDEN = 8, 32, 32

    key = jax.random.PRNGKey(0)
    k_feat, k_params = jax.random.split(key)
    feat = jax.random.normal(k_feat, (B, FEATURE), jnp.float32)
    params = init_params(k_params, FEATURE, HIDDEN)

    out = box_decoder(feat, params)          # f32 operands -> tight tolerance
    out = jax.block_until_ready(out)

    ref = box_decoder_ref(feat, params)
    assert out.shape == (B, NUM_OUT)
    assert jnp.allclose(out, ref, atol=2e-5, rtol=2e-5), "mismatch vs reference"

    print("KERNEL_OK")
</pallas_src>

<mosaic_0001>
module attributes {stable_mosaic.version = 11 : i64} {
  func.func @box_decoder_kernel(%arg0: i32, %arg1: memref<8x32xf32, #tpu.memory_space<vmem>>, %arg2: memref<32x32xf32, #tpu.memory_space<vmem>>, %arg3: memref<1x32xf32, #tpu.memory_space<vmem>>, %arg4: memref<32x128xf32, #tpu.memory_space<vmem>>, %arg5: memref<32x128xf32, #tpu.memory_space<vmem>>, %arg6: memref<1x128xf32, #tpu.memory_space<vmem>>, %arg7: memref<8x128xf32, #tpu.memory_space<vmem>>) attributes {dimension_semantics = [#tpu.dimension_semantics<parallel>], iteration_bounds = array<i64: 1>, scalar_prefetch = 0 : i64, scratch_operands = 0 : i64, tpu.core_type = #tpu.core_type<tc>, window_params = [{transform_indices = @transform_0, window_bounds = array<i64: 8, 32>}, {pipeline_mode = #tpu.pipeline_mode<synchronous>, transform_indices = @transform_1, window_bounds = array<i64: 32, 32>}, {pipeline_mode = #tpu.pipeline_mode<synchronous>, transform_indices = @transform_2, window_bounds = array<i64: 1, 32>}, {pipeline_mode = #tpu.pipeline_mode<synchronous>, transform_indices = @transform_3, window_bounds = array<i64: 32, 128>}, {pipeline_mode = #tpu.pipeline_mode<synchronous>, transform_indices = @transform_4, window_bounds = array<i64: 32, 128>}, {pipeline_mode = #tpu.pipeline_mode<synchronous>, transform_indices = @transform_5, window_bounds = array<i64: 1, 128>}, {transform_indices = @transform_6, window_bounds = array<i64: 8, 128>}]} {
    %c0 = arith.constant 0 : index
    %c0_0 = arith.constant 0 : index
    %0 = vector.load %arg1[%c0, %c0_0] : memref<8x32xf32, #tpu.memory_space<vmem>>, vector<8x32xf32>
    %c0_1 = arith.constant 0 : index
    %c0_2 = arith.constant 0 : index
    %1 = vector.load %arg2[%c0_1, %c0_2] : memref<32x32xf32, #tpu.memory_space<vmem>>, vector<32x32xf32>
    %cst = arith.constant dense<0.000000e+00> : vector<8x32xf32>
    %2 = tpu.matmul %0, %1, %cst {dimension_numbers = #tpu.dot_dimension_numbers<[1], [0], [0], [1], [0, 0, 1, 1], [], []>} : vector<8x32xf32>, vector<32x32xf32>, vector<8x32xf32> -> vector<8x32xf32>
    %c0_3 = arith.constant 0 : index
    %c0_4 = arith.constant 0 : index
    %3 = vector.load %arg3[%c0_3, %c0_4] : memref<1x32xf32, #tpu.memory_space<vmem>>, vector<1x32xf32>
    %4 = vector.broadcast %3 : vector<1x32xf32> to vector<8x32xf32>
    %5 = arith.addf %2, %4 : vector<8x32xf32>
    %cst_5 = arith.constant 0.000000e+00 : f32
    %6 = vector.broadcast %cst_5 : f32 to vector<8x32xf32>
    %7 = arith.maximumf %5, %6 : vector<8x32xf32>
    %c0_6 = arith.constant 0 : index
    %c0_7 = arith.constant 0 : index
    %8 = vector.load %arg4[%c0_6, %c0_7] : memref<32x128xf32, #tpu.memory_space<vmem>>, vector<32x128xf32>
    %cst_8 = arith.constant dense<0.000000e+00> : vector<8x128xf32>
    %9 = tpu.matmul %0, %8, %cst_8 {dimension_numbers = #tpu.dot_dimension_numbers<[1], [0], [0], [1], [0, 0, 1, 1], [], []>} : vector<8x32xf32>, vector<32x128xf32>, vector<8x128xf32> -> vector<8x128xf32>
    %c0_9 = arith.constant 0 : index
    %c0_10 = arith.constant 0 : index
    %10 = vector.load %arg5[%c0_9, %c0_10] : memref<32x128xf32, #tpu.memory_space<vmem>>, vector<32x128xf32>
    %cst_11 = arith.constant dense<0.000000e+00> : vector<8x128xf32>
    %11 = tpu.matmul %7, %10, %cst_11 {dimension_numbers = #tpu.dot_dimension_numbers<[1], [0], [0], [1], [0, 0, 1, 1], [], []>} : vector<8x32xf32>, vector<32x128xf32>, vector<8x128xf32> -> vector<8x128xf32>
    %12 = arith.addf %9, %11 : vector<8x128xf32>
    %c0_12 = arith.constant 0 : index
    %c0_13 = arith.constant 0 : index
    %13 = vector.load %arg6[%c0_12, %c0_13] : memref<1x128xf32, #tpu.memory_space<vmem>>, vector<1x128xf32>
    %14 = vector.broadcast %13 : vector<1x128xf32> to vector<8x128xf32>
    %15 = arith.addf %12, %14 : vector<8x128xf32>
    %16 = tpu.iota {dimensions = array<i32: 1>} : vector<8x128xi32>
    %c3_i32 = arith.constant 3 : i32
    %17 = vector.broadcast %c3_i32 : i32 to vector<8x128xi32>
    %18 = arith.cmpi slt, %16, %17 : vector<8x128xi32>
    %c3_i32_14 = arith.constant 3 : i32
    %19 = vector.broadcast %c3_i32_14 : i32 to vector<8x128xi32>
    %20 = arith.cmpi sge, %16, %19 : vector<8x128xi32>
    %c6_i32 = arith.constant 6 : i32
    %21 = vector.broadcast %c6_i32 : i32 to vector<8x128xi32>
    %22 = arith.cmpi slt, %16, %21 : vector<8x128xi32>
    %23 = arith.andi %20, %22 : vector<8x128xi1>
    %c6_i32_15 = arith.constant 6 : i32
    %24 = vector.broadcast %c6_i32_15 : i32 to vector<8x128xi32>
    %25 = arith.cmpi sge, %16, %24 : vector<8x128xi32>
    %c10_i32 = arith.constant 10 : i32
    %26 = vector.broadcast %c10_i32 : i32 to vector<8x128xi32>
    %27 = arith.cmpi slt, %16, %26 : vector<8x128xi32>
    %28 = arith.andi %25, %27 : vector<8x128xi1>
    %cst_16 = arith.constant 0.000000e+00 : f32
    %29 = vector.broadcast %cst_16 : f32 to vector<8x128xf32>
    %30 = arith.select %28, %15, %29 : vector<8x128xi1>, vector<8x128xf32>
    %31 = arith.mulf %30, %30 : vector<8x128xf32>
    %cst_17 = arith.constant dense<0.000000e+00> : vector<8xf32>
    %32 = vector.multi_reduction <add>, %31, %cst_17 [1] : vector<8x128xf32> to vector<8xf32>
    %33 = vector.shape_cast %32 : vector<8xf32> to vector<8x1xf32>
    %cst_18 = arith.constant 1.000000e-24 : f32
    %34 = vector.broadcast %cst_18 : f32 to vector<8x1xf32>
    %35 = arith.addf %33, %34 : vector<8x1xf32>
    %36 = math.rsqrt %35 : vector<8x1xf32>
    %37 = vector.broadcast %36 : vector<8x1xf32> to vector<8x128xf32>
    %38 = arith.mulf %30, %37 : vector<8x128xf32>
    %39 = math.tanh %15 : vector<8x128xf32>
    %40 = arith.negf %15 : vector<8x128xf32>
    %41 = math.exp %40 : vector<8x128xf32>
    %cst_19 = arith.constant 1.000000e+00 : f32
    %42 = vector.broadcast %cst_19 : f32 to vector<8x128xf32>
    %43 = arith.addf %42, %41 : vector<8x128xf32>
    %44 = arith.divf %42, %43 : vector<8x128xf32>
    %cst_20 = arith.constant 2.000000e+00 : f32
    %45 = vector.broadcast %cst_20 : f32 to vector<8x128xf32>
    %46 = arith.mulf %44, %45 : vector<8x128xf32>
    %47 = arith.select %23, %46, %38 : vector<8x128xi1>, vector<8x128xf32>
    %48 = arith.select %18, %39, %47 : vector<8x128xi1>, vector<8x128xf32>
    %c0_21 = arith.constant 0 : index
    %c0_22 = arith.constant 0 : index
    %49 = vector.load %arg7[%c0_21, %c0_22] : memref<8x128xf32, #tpu.memory_space<vmem>>, vector<8x128xf32>
    tpu.vector_store %arg7[%c0_21, %c0_22], %48 {strides = array<i32>} : memref<8x128xf32, #tpu.memory_space<vmem>>, vector<8x128xf32>,
    return
  }
  func.func @transform_0(%arg0: i32) -> (i32, i32) {
    %c0_i32 = arith.constant 0 : i32
    %c0_i32_0 = arith.constant 0 : i32
    return %arg0, %c0_i32 : i32, i32
  }
  func.func @transform_1(%arg0: i32) -> (i32, i32) {
    %c0_i32 = arith.constant 0 : i32
    %c0_i32_0 = arith.constant 0 : i32
    %c0_i32_1 = arith.constant 0 : i32
    return %c0_i32, %c0_i32_0 : i32, i32
  }
  func.func @transform_2(%arg0: i32) -> (i32, i32) {
    %c0_i32 = arith.constant 0 : i32
    %c0_i32_0 = arith.constant 0 : i32
    %c0_i32_1 = arith.constant 0 : i32
    return %c0_i32, %c0_i32_0 : i32, i32
  }
  func.func @transform_3(%arg0: i32) -> (i32, i32) {
    %c0_i32 = arith.constant 0 : i32
    %c0_i32_0 = arith.constant 0 : i32
    %c0_i32_1 = arith.constant 0 : i32
    return %c0_i32, %c0_i32_0 : i32, i32
  }
  func.func @transform_4(%arg0: i32) -> (i32, i32) {
    %c0_i32 = arith.constant 0 : i32
    %c0_i32_0 = arith.constant 0 : i32
    %c0_i32_1 = arith.constant 0 : i32
    return %c0_i32, %c0_i32_0 : i32, i32
  }
  func.func @transform_5(%arg0: i32) -> (i32, i32) {
    %c0_i32 = arith.constant 0 : i32
    %c0_i32_0 = arith.constant 0 : i32
    %c0_i32_1 = arith.constant 0 : i32
    return %c0_i32, %c0_i32_0 : i32, i32
  }
  func.func @transform_6(%arg0: i32) -> (i32, i32) {
    %c0_i32 = arith.constant 0 : i32
    %c0_i32_0 = arith.constant 0 : i32
    return %arg0, %c0_i32 : i32, i32
  }
}

</mosaic_0001>

<llo_original>
// kernel: tpu_custom_call.1
$region0: #{tpu_custom_call.1}
  #allocation0 [shape = 'u32[]', space=smem, size = 0x4, offset = 0x4, fixed_abs, tag = 'smem constant byte address 0x4 - core index']
  #allocation1 [shape = 'u32[72,128]{1,0:T(1,128)}', space=vmem, size = 0x9000, scoped, tag = 'internal scratch']
  %s0 = inlined_call_operand.hbm [shape: f32[8,32], index: 0, kind: input, shape index: {}]
  %s1 = inlined_call_operand.hbm [shape: f32[32,32], index: 1, kind: input, shape index: {}]
  %s2 = inlined_call_operand.vmem [shape: f32[1,32], index: 2, kind: input, shape index: {}]
  %s3 = inlined_call_operand.hbm [shape: f32[32,128], index: 3, kind: input, shape index: {}]
  %s4 = inlined_call_operand.hbm [shape: f32[32,128], index: 4, kind: input, shape index: {}]
  %s5 = inlined_call_operand.vmem [shape: f32[1,128], index: 5, kind: input, shape index: {}]
  %s6 = inlined_call_operand.hbm [shape: f32[8,128], index: 6, kind: output, shape index: {}]
  %s7 = sld [smem:[#allocation0]]
  $region50: #{tpu_custom_call.1} parent=0
    _
  %s9 = ssub.s32 1, %s7
  %s10 = scalar_select 0, %s9, %s7
  $region1: #{tpu_custom_call.1} parent=0
    #allocation2 [shape = 'u8[4096]{0}', space=vmem, size = 0x1000, scoped, tag = 'input window, operand 0, single buffered']
    #allocation3 [shape = 's32[1]{0}', space=sflag, size = 0x4, scoped, tag = 'scoped memory for tpu_custom_call.1']
    #allocation4 [shape = 's32[1]{0}', space=sflag, size = 0x4, scoped, tag = 'scoped memory for tpu_custom_call.1']
    #allocation5 [shape = 'u8[16384]{0}', space=vmem, size = 0x4000, scoped, tag = 'input window, operand 1, single buffered']
    #allocation6 [shape = 's32[1]{0}', space=sflag, size = 0x4, scoped, tag = 'scoped memory for tpu_custom_call.1']
    #allocation7 [shape = 'u8[16384]{0}', space=vmem, size = 0x4000, scoped, tag = 'input window, operand 3, single buffered']
    #allocation8 [shape = 'u8[16384]{0}', space=vmem, size = 0x4000, scoped, tag = 'input window, operand 4, single buffered']
    #allocation9 [shape = 's32[1]{0}', space=sflag, size = 0x4, scoped, tag = 'scoped memory for tpu_custom_call.1']
    #allocation10 [shape = 'u8[4096]{0}', space=vmem, size = 0x1000, scoped, tag = 'output window, operand 0, single buffered']
    %11 = vsyncpa [#allocation3], 0
    %12 = vsyncpa [#allocation6], 0
    %13 = vsyncpa [#allocation9], 0
    %14 = vsyncpa [#allocation4], 0
    // Predicated region
    $region2: #{tpu_custom_call.1} parent=1 // pred_check
      _
    $region3: #{tpu_custom_call.1} parent=1 // pred_check_branch
      %16 = sbr.rel (0) target = $region5
    $region4: #{tpu_custom_call.1} parent=1 // pred_region
      %18 = vsyncadd [#allocation3], 0
      %s20 = sshll.u32 %s0, 4
      %s21 = int_to_ptr.hbm [resolvable:$true] %s20
      %s22 = sshll.u32 [#allocation2], 4
      %s23 = int_to_ptr.vmem [resolvable:$true] %s22
      %25 = dma.hbm_to_vmem [thread:$0]  %s21, 128, %s23, [#allocation3]
    $region5: #{tpu_custom_call.1} parent=1 // pred_fallthru
      _
    // Predicated region
    $region6: #{tpu_custom_call.1} parent=1 // pred_check
      _
    $region7: #{tpu_custom_call.1} parent=1 // pred_check_branch
      %27 = sbr.rel (0) target = $region9
    $region8: #{tpu_custom_call.1} parent=1 // pred_region
      %29 = vsyncadd [#allocation6], 0
      %s30 = sshll.u32 %s1, 4
      %s31 = int_to_ptr.hbm [resolvable:$true] %s30
      %s32 = sshll.u32 [#allocation5], 4
      %s33 = int_to_ptr.vmem [resolvable:$true] %s32
      %38 = dma.hbm_to_vmem [thread:$0]  %s31, 512, %s33, [#allocation6], 128, 128, 8
    $region9: #{tpu_custom_call.1} parent=1 // pred_fallthru
      _
    // Predicated region
    $region10: #{tpu_custom_call.1} parent=1 // pred_check
      _
    $region11: #{tpu_custom_call.1} parent=1 // pred_check_branch
      %40 = sbr.rel (0) target = $region13
    $region12: #{tpu_custom_call.1} parent=1 // pred_region
      _
    $region13: #{tpu_custom_call.1} parent=1 // pred_fallthru
      _
    // Predicated region
    $region14: #{tpu_custom_call.1} parent=1 // pred_check
      _
    $region15: #{tpu_custom_call.1} parent=1 // pred_check_branch
      %42 = sbr.rel (0) target = $region17
    $region16: #{tpu_custom_call.1} parent=1 // pred_region
      %44 = vsyncadd [#allocation6], 0
      %s45 = sshll.u32 %s3, 4
      %s46 = int_to_ptr.hbm [resolvable:$true] %s45
      %s47 = sshll.u32 [#allocation7], 4
      %s48 = int_to_ptr.vmem [resolvable:$true] %s47
      %53 = dma.hbm_to_vmem [thread:$0]  %s46, 512, %s48, [#allocation6], 128, 128, 8
    $region17: #{tpu_custom_call.1} parent=1 // pred_fallthru
      _
    // Predicated region
    $region18: #{tpu_custom_call.1} parent=1 // pred_check
      _
    $region19: #{tpu_custom_call.1} parent=1 // pred_check_branch
      %55 = sbr.rel (0) target = $region21
    $region20: #{tpu_custom_call.1} parent=1 // pred_region
      %57 = vsyncadd [#allocation9], 0
      %s58 = sshll.u32 %s4, 4
      %s59 = int_to_ptr.hbm [resolvable:$true] %s58
      %s60 = sshll.u32 [#allocation8], 4
      %s61 = int_to_ptr.vmem [resolvable:$true] %s60
      %66 = dma.hbm_to_vmem [thread:$0]  %s59, 512, %s61, [#allocation9], 128, 128, 8
    $region21: #{tpu_custom_call.1} parent=1 // pred_fallthru
      _
    // Predicated region
    $region22: #{tpu_custom_call.1} parent=1 // pred_check
      _
    $region23: #{tpu_custom_call.1} parent=1 // pred_check_branch
      %68 = sbr.rel (0) target = $region25
    $region24: #{tpu_custom_call.1} parent=1 // pred_region
      _
    $region25: #{tpu_custom_call.1} parent=1 // pred_fallthru
      _
    // Predicated region
    $region26: #{tpu_custom_call.1} parent=1 // pred_check
      _
    $region27: #{tpu_custom_call.1} parent=1 // pred_check_branch
      %70 = sbr.rel (0) target = $region29
    $region28: #{tpu_custom_call.1} parent=1 // pred_region
      %72 = dma.done [#allocation3], 128
    $region29: #{tpu_custom_call.1} parent=1 // pred_fallthru
      _
    // Predicated region
    $region30: #{tpu_custom_call.1} parent=1 // pred_check
      _
    $region31: #{tpu_custom_call.1} parent=1 // pred_check_branch
      %74 = sbr.rel (0) target = $region33
    $region32: #{tpu_custom_call.1} parent=1 // pred_region
      %76 = dma.done [#allocation6], 512
    $region33: #{tpu_custom_call.1} parent=1 // pred_fallthru
      _
    // Predicated region
    $region34: #{tpu_custom_call.1} parent=1 // pred_check
      _
    $region35: #{tpu_custom_call.1} parent=1 // pred_check_branch
      %78 = sbr.rel (0) target = $region37
    $region36: #{tpu_custom_call.1} parent=1 // pred_region
      %80 = dma.done [#allocation6], 512
    $region37: #{tpu_custom_call.1} parent=1 // pred_fallthru
      _
    // Predicated region
    $region38: #{tpu_custom_call.1} parent=1 // pred_check
      _
    $region39: #{tpu_custom_call.1} parent=1 // pred_check_branch
      %82 = sbr.rel (0) target = $region41
    $region40: #{tpu_custom_call.1} parent=1 // pred_region
      %84 = dma.done [#allocation9], 512
    $region41: #{tpu_custom_call.1} parent=1 // pred_fallthru
      _
    %v85 = vld [vmem:[#allocation2] sm:$0xff]
    %v86 = vld [vmem:[#allocation5] sm:$0xff]
    %v87 = vld [vmem:[#allocation5 + $0x8] sm:$0xff]
    %v88 = vld [vmem:[#allocation5 + $0x10] sm:$0xff]
    %v89 = vld [vmem:[#allocation5 + $0x18] sm:$0xff]
    %v90 = vld [vmem:[%s2] sm:$0x1]
    %v92 = vperm.slane %v90, 0
    %vm94 = vcmask 261120
    %v96 = vsel %vm94, %v85, 0
    %98 = vmatpush.msra.mxu0 0.0
    %99 = vmatpush.msra.mxu0 0.0
    %100 = vmatpush.msra.mxu0 0.0
    %101 = vmatpush.msra.mxu0 0.0
    %102 = vmatpush.msra.mxu0 0.0
    %103 = vmatpush.msra.mxu0 0.0
    %104 = vmatpush.msra.mxu0 0.0
    %105 = vmatpush.msra.mxu0 0.0
    %106 = vmatpush.msra.mxu0 0.0
    %107 = vmatpush.msra.mxu0 0.0
    %108 = vmatpush.msra.mxu0 0.0
    %109 = vmatpush.msra.mxu0 0.0
    %110 = vmatpush.msra.mxu0 %v89
    %111 = vmatpush.msra.mxu0 %v88
    %112 = vmatpush.msra.mxu0 %v87
    %113 = vmatpush.msra.mxu0 %v86
    %114 = vmatmul.f32.gmra.mxu0 %v96
    %v115 = vpop.f32.mrf.mxu0
    %v116 = vadd.f32 %v92, %v115
    %117 = vdwg.mxu0
    %v118 = vmax.f32 %v116, 0.0
    %v119 = vld [vmem:[#allocation7] sm:$0xff]
    %v120 = vld [vmem:[#allocation7 + $0x8] sm:$0xff]
    %v121 = vld [vmem:[#allocation7 + $0x10] sm:$0xff]
    %v122 = vld [vmem:[#allocation7 + $0x18] sm:$0xff]
    %v123 = vld [vmem:[#allocation8] sm:$0xff]
    %v124 = vld [vmem:[#allocation8 + $0x8] sm:$0xff]
    %v125 = vld [vmem:[#allocation8 + $0x10] sm:$0xff]
    %v126 = vld [vmem:[#allocation8 + $0x18] sm:$0xff]
    %v128 = vsel %vm94, %v118, 0
    %130 = vmatpush.msra.mxu0 0.0
    %131 = vmatpush.msra.mxu0 0.0
    %132 = vmatpush.msra.mxu0 0.0
    %133 = vmatpush.msra.mxu0 0.0
    %134 = vmatpush.msra.mxu0 0.0
    %135 = vmatpush.msra.mxu0 0.0
    %136 = vmatpush.msra.mxu0 0.0
    %137 = vmatpush.msra.mxu0 0.0
    %138 = vmatpush.msra.mxu0 0.0
    %139 = vmatpush.msra.mxu0 0.0
    %140 = vmatpush.msra.mxu0 0.0
    %141 = vmatpush.msra.mxu0 0.0
    %142 = vmatpush.msra.mxu0 %v126
    %143 = vmatpush.msra.mxu0 %v125
    %144 = vmatpush.msra.mxu0 %v124
    %145 = vmatpush.msra.mxu0 %v123
    %146 = vmatmul.f32.gmra.mxu0 %v128
    %v147 = vpop.f32.mrf.mxu0
    %v148 = vadd.f32 0.0, %v147
    %149 = vdwg.mxu0
    %150 = vmatpush.msra.mxu0 0.0
    %151 = vmatpush.msra.mxu0 0.0
    %152 = vmatpush.msra.mxu0 0.0
    %153 = vmatpush.msra.mxu0 0.0
    %154 = vmatpush.msra.mxu0 0.0
    %155 = vmatpush.msra.mxu0 0.0
    %156 = vmatpush.msra.mxu0 0.0
    %157 = vmatpush.msra.mxu0 0.0
    %158 = vmatpush.msra.mxu0 0.0
    %159 = vmatpush.msra.mxu0 0.0
    %160 = vmatpush.msra.mxu0 0.0
    %161 = vmatpush.msra.mxu0 0.0
    %162 = vmatpush.msra.mxu0 %v122
    %163 = vmatpush.msra.mxu0 %v121
    %164 = vmatpush.msra.mxu0 %v120
    %165 = vmatpush.msra.mxu0 %v119
    %166 = vmatmul.f32.gmra.mxu0 %v96
    %v167 = vpop.f32.mrf.mxu0
    %v168 = vadd.f32 %v148, %v167
    %169 = vdwg.mxu0
    %v170 = vld [vmem:[%s5] sm:$0x1]
    %v172 = vperm.slane %v170, 0
    %v174 = vadd.f32 %v168, %v172
    %v175 = vlaneseq
    %v176 = vand.u32 %v175, 127
    %vm177 = vcmp.lt.s32.totalorder %v176, 3
    %vm178 = vcmp.ge.s32.totalorder %v176, 3
    %vm179 = vcmp.lt.s32.totalorder %v176, 6
    %vm180 = vmand %vm178, %vm179
    %vm181 = vcmp.ge.s32.totalorder %v176, 6
    %vm182 = vcmp.lt.s32.totalorder %v176, 10
    %vm183 = vmand %vm181, %vm182
    %v184 = vsel %vm183, %v174, 0.0
    %v185 = vmul.f32 %v184, %v184
    %186 = vadd.xlane.f32.xlu0 %v185
    %v187 = vpop.xlane.xlu0 %186
    %v188 = vadd.f32 %v187, 1e-24
    %v189 = vrsqrt.pop %v188
    %v190 = vmul.f32 %v189, %v188
    %v191 = vmul.f32 %v190, %v189
    %v192 = vmul.f32 0.5, %v191
    %v193 = vsub.f32 1.5, %v192
    %v194 = vmul.f32 %v189, %v193
    %vm195 = vweird.f32 %v188
    %vm196 = vweird.f32 %v189
    %vm197 = vmor %vm195, %vm196
    %v198 = vsel %vm197, %v189, %v194
    %v199 = vmul.f32 %v184, %v198
    %v200 = vtanh.pop %v174
    %v201 = vxor.u32 %v174, 2147483648
    %v202 = vmul.f32 %v201, 1.442695
    %v203 = vpow.pop %v202
    %v204 = vadd.f32 %v203, 1.0
    %v205 = vrcp.pop %v204
    %v206 = vmul.f32 %v204, %v205
    %v207 = vsub.f32 1.0, %v206
    %v208 = vmul.f32 %v205, %v207
    %v209 = vadd.f32 %v205, %v208
    %vm210 = vweird.f32 %v204
    %vm211 = vweird.f32 %v205
    %vm212 = vmor %vm210, %vm211
    %v213 = vsel %vm212, %v205, %v209
    %v214 = vand.u32 2147483647, %v204
    %vm215 = vcmp.eq.f32.partialorder %v214, 8.507059e+37
    %v216 = vand.u32 %v204, 2147483648
    %v217 = vor.u32 1.1754944e-38, %v216
    %v218 = vsel %vm215, %v217, %v213
    %v219 = vmul.f32 1.0, %v218
    %v220 = vmul.f32 %v219, 2.0
    %v221 = vsel %vm180, %v220, %v199
    %v222 = vsel %vm177, %v200, %v221
    %223 = vst [vmem:[#allocation10] sm:$0xff] %v222
    // Predicated region
    $region42: #{tpu_custom_call.1} parent=1 // pred_check
      _
    $region43: #{tpu_custom_call.1} parent=1 // pred_check_branch
      %225 = sbr.rel (0) target = $region45
    $region44: #{tpu_custom_call.1} parent=1 // pred_region
      %227 = vsyncadd [#allocation4], 0
      %s229 = sshll.u32 [#allocation10], 4
      %s230 = int_to_ptr.vmem [resolvable:$true] %s229
      %s231 = sshll.u32 %s6, 4
      %s232 = int_to_ptr.hbm [resolvable:$true] %s231
      %234 = dma.vmem_to_hbm [thread:$0]  %s230, 128, %s232, [#allocation4]
    $region45: #{tpu_custom_call.1} parent=1 // pred_fallthru
      _
    // Predicated region
    $region46: #{tpu_custom_call.1} parent=1 // pred_check
      _
    $region47: #{tpu_custom_call.1} parent=1 // pred_check_branch
      %236 = sbr.rel (0) target = $region49
    $region48: #{tpu_custom_call.1} parent=1 // pred_region
      %238 = dma.done [#allocation4], 128
    $region49: #{tpu_custom_call.1} parent=1 // pred_fallthru
      _
    %239 = vsyncpa [#allocation3], 1
    %240 = vsyncpa [#allocation6], 1
    %241 = vsyncpa [#allocation9], 1
    %242 = vsyncpa [#allocation4], 1

</llo_original>
